<compile_context>
chip_gen: v7x
topology: tpu7x:2x2x1
jax: 0.10.0
libtpu: 0.0.40
codegen_flags: <defaults>
</compile_context>

<pallas_src>
import functools

import jax
import jax.numpy as jnp
import numpy as np
from jax.experimental import pallas as pl
from jax.experimental.pallas import tpu as pltpu


def at_kernel(v_ref, w1_ref, b1_ref, w2t_ref, res_ref, amax_ref, *, matmul_dtype):
    """One batch tile: score MLP, softmax over aggregators, weighted sum, argmax."""
    TB, N, D = v_ref.shape

    v = v_ref[...]
    v_f32 = v.astype(jnp.float32)

    # --- score_func: Linear(D->H) -> tanh -> Linear(H->1, no bias) ----------------
    v2 = v.reshape(TB * N, D)                                   # collapse leading dims; lane axis unchanged
    h = jnp.tanh(
        jnp.dot(v2.astype(matmul_dtype), w1_ref[...].astype(matmul_dtype),
                preferred_element_type=jnp.float32)
        + b1_ref[...]
    )                                                           # (TB*N, H) f32, MXU + VPU/EUP
    # H->1 projection as VPU multiply + lane reduce (avoids a width-1 MXU matmul).
    s = jnp.sum(h * w2t_ref[...], axis=-1, keepdims=True)       # (TB*N, 1)
    s = s.reshape(TB, N, 1)                                     # (TB, N, 1)

    # --- softmax over the aggregator axis (dim=1), numerically stable -------------
    m = jnp.max(s, axis=1, keepdims=True)                       # (TB, 1, 1)
    e = jnp.exp(s - m)                                          # (TB, N, 1)
    den = jnp.sum(e, axis=1, keepdims=True)                     # (TB, 1, 1)
    inv = pl.reciprocal(den, approx=True)                       # EUP reciprocal
    inv = inv * (2.0 - den * inv)                               # Newton refine x2 ->
    inv = inv * (2.0 - den * inv)                               #   f32-accurate 1/den

    # --- res = (alpha * values).sum(dim=1), without materializing alpha -----------
    num = jnp.sum(e * v_f32, axis=1)                            # (TB, D)
    res_ref[...] = (num * inv.reshape(TB, 1)).astype(res_ref.dtype)

    # --- aggr_max = argmax(alpha, dim=1); argmax(alpha) == argmax(s) ---------------
    # (exact float compare is safe: m is the max over these same s values; first-index
    #  tie-break matches torch/jnp argmax)
    idx = jax.lax.broadcasted_iota(jnp.int32, (TB, N, 1), 1)
    amax = jnp.min(jnp.where(s == m, idx, jnp.int32(N)), axis=1)  # (TB, 1)
    amax_ref[...] = amax.astype(jnp.int32)


def _choose_block_b(B, N, D, vmem_budget_bytes=8 * 1024 * 1024):
    """Pick a batch tile: big enough to amortize per-step overhead (~0.35 us/step),
    small enough that double-buffered value tiles stay well inside scoped VMEM
    (also valid on v7x's smaller VMEM)."""
    row_bytes = max(N * D * 4, 1)
    cap = max(8, min(2048, vmem_budget_bytes // (2 * row_bytes)))
    if B <= cap:
        return B                      # single tile == full batch (always spec-legal)
    return max(8, (cap // 8) * 8)     # sub-block of B: must be a multiple of 8 (sublanes)


def at_forward(queries, keys, values, w1, b1, w2, *, block_b=None, matmul_dtype=None):
    """Pallas wrapper. queries/keys are unused (as in the PyTorch module)."""
    del queries, keys
    B, N, D = values.shape
    H = w1.shape[1]

    if matmul_dtype is None:
        # Keep f32 by default (exactness; v5e). Pass jnp.bfloat16 on v6e/v7x for
        # native-rate MXU if the workload tolerates it.
        matmul_dtype = values.dtype

    if block_b is None:
        block_b = _choose_block_b(B, N, D)
    block_b = min(block_b, B)
    if block_b < B and block_b % 8 != 0:
        block_b = max(8, (block_b // 8) * 8)

    # Pad B to a multiple of the tile so every grid step writes a full output block.
    num_tiles = pl.cdiv(B, block_b)
    B_pad = num_tiles * block_b
    v_in = values
    if B_pad != B:
        v_in = jnp.concatenate(
            [values, jnp.zeros((B_pad - B, N, D), values.dtype)], axis=0)

    w2t = w2.reshape(1, H)  # (H, 1) column -> lane-dense (1, H) row (equals transpose)

    cost = pl.CostEstimate(
        flops=int(2 * B_pad * N * D * H + 2 * B_pad * N * H + 2 * B_pad * N * D
                  + 5 * B_pad * N),
        transcendentals=int(B_pad * N * H + B_pad * N + B_pad),
        bytes_accessed=int((B_pad * N * D + B_pad * D) * 4 + B_pad * 4
                           + (D * H + H + H) * 4),
    )

    kernel = functools.partial(at_kernel, matmul_dtype=matmul_dtype)
    res, amax = pl.pallas_call(
        kernel,
        out_shape=(
            jax.ShapeDtypeStruct((B_pad, D), jnp.float32),
            jax.ShapeDtypeStruct((B_pad, 1), jnp.int32),
        ),
        grid=(num_tiles,),
        in_specs=[
            pl.BlockSpec((block_b, N, D), lambda i: (i, 0, 0)),  # values: tiled over batch
            pl.BlockSpec((D, H), lambda i: (0, 0)),              # W1: VMEM-resident
            pl.BlockSpec((1, H), lambda i: (0, 0)),              # b1: VMEM-resident
            pl.BlockSpec((1, H), lambda i: (0, 0)),              # w2^T: VMEM-resident
        ],
        out_specs=(
            pl.BlockSpec((block_b, D), lambda i: (i, 0)),
            pl.BlockSpec((block_b, 1), lambda i: (i, 0)),
        ),
        compiler_params=pltpu.CompilerParams(
            dimension_semantics=("parallel",),   # shard batch tiles across TCs (v7x)
        ),
        cost_estimate=cost,
    )(v_in, w1, b1, w2t)

    if B_pad != B:
        res = res[:B]
        amax = amax[:B]
    return res, amax


def ref_forward(values, w1, b1, w2):
    """Pure-JAX reference mirroring the PyTorch module exactly."""
    h = jnp.tanh(values @ w1 + b1)            # (B, N, H)
    s = h @ w2                                # (B, N, 1)
    alpha = jax.nn.softmax(s, axis=1)         # (B, N, 1)
    res = (alpha * values).sum(axis=1)        # (B, D)
    amax = jnp.argmax(alpha, axis=1)          # (B, 1)
    return res, amax


if __name__ == "__main__":
    # Small shapes consistent with the module: batch=2, num_aggregators=8,
    # key_size=32, num_hiddens=32.
    B, N, D, H = 2, 8, 32, 32

    key = jax.random.PRNGKey(0)
    kq, kk, kv, kw1, kb1, kw2, kv2 = jax.random.split(key, 7)

    queries = jax.random.normal(kq, (B, N, D), dtype=jnp.float32)  # unused, like torch module
    keys_in = jax.random.normal(kk, (B, N, D), dtype=jnp.float32)  # unused
    values = jax.random.normal(kv, (B, N, D), dtype=jnp.float32)

    # Deterministic parameter init mimicking nn.Linear's uniform(-1/sqrt(fan_in), ...).
    lim1 = 1.0 / np.sqrt(D)
    lim2 = 1.0 / np.sqrt(H)
    w1 = jax.random.uniform(kw1, (D, H), minval=-lim1, maxval=lim1, dtype=jnp.float32)
    b1 = jax.random.uniform(kb1, (1, H), minval=-lim1, maxval=lim1, dtype=jnp.float32)
    w2 = jax.random.uniform(kw2, (H, 1), minval=-lim2, maxval=lim2, dtype=jnp.float32)

    # --- small case (B=2): whole batch in one tile -----------------------------------
    res, aggr_max = at_forward(queries, keys_in, values, w1, b1, w2)
    jax.block_until_ready((res, aggr_max))

    res_ref, amax_ref = ref_forward(values, w1, b1, w2)
    np.testing.assert_allclose(np.asarray(res), np.asarray(res_ref), rtol=1e-5, atol=1e-5)
    np.testing.assert_array_equal(np.asarray(aggr_max), np.asarray(amax_ref).astype(np.int32))

    # --- larger batch: exercises the tiled / double-buffered / parallel path ---------
    B2 = 1024
    values2 = jax.random.normal(kv2, (B2, N, D), dtype=jnp.float32)
    res2, amax2 = at_forward(None, None, values2, w1, b1, w2, block_b=256)
    jax.block_until_ready((res2, amax2))

    res2_ref, amax2_ref = ref_forward(values2, w1, b1, w2)
    np.testing.assert_allclose(np.asarray(res2), np.asarray(res2_ref), rtol=1e-5, atol=1e-5)
    np.testing.assert_array_equal(np.asarray(amax2), np.asarray(amax2_ref).astype(np.int32))

    print("KERNEL_OK")
</pallas_src>

<mosaic_0001>
module attributes {stable_mosaic.version = 11 : i64} {
  func.func @at_kernel(%arg0: i32, %arg1: memref<2x8x32xf32, #tpu.memory_space<vmem>>, %arg2: memref<32x32xf32, #tpu.memory_space<vmem>>, %arg3: memref<1x32xf32, #tpu.memory_space<vmem>>, %arg4: memref<1x32xf32, #tpu.memory_space<vmem>>, %arg5: memref<2x32xf32, #tpu.memory_space<vmem>>, %arg6: memref<2x1xi32, #tpu.memory_space<vmem>>) attributes {dimension_semantics = [#tpu.dimension_semantics<parallel>], iteration_bounds = array<i64: 1>, scalar_prefetch = 0 : i64, scratch_operands = 0 : i64, tpu.core_type = #tpu.core_type<tc>, window_params = [{transform_indices = @transform_0, window_bounds = array<i64: 2, 8, 32>}, {pipeline_mode = #tpu.pipeline_mode<synchronous>, transform_indices = @transform_1, window_bounds = array<i64: 32, 32>}, {pipeline_mode = #tpu.pipeline_mode<synchronous>, transform_indices = @transform_2, window_bounds = array<i64: 1, 32>}, {pipeline_mode = #tpu.pipeline_mode<synchronous>, transform_indices = @transform_3, window_bounds = array<i64: 1, 32>}, {transform_indices = @transform_4, window_bounds = array<i64: 2, 32>}, {transform_indices = @transform_5, window_bounds = array<i64: 2, 1>}]} {
    %c0 = arith.constant 0 : index
    %c0_0 = arith.constant 0 : index
    %c0_1 = arith.constant 0 : index
    %0 = vector.load %arg1[%c0, %c0_0, %c0_1] : memref<2x8x32xf32, #tpu.memory_space<vmem>>, vector<2x8x32xf32>
    %1 = vector.shape_cast %0 : vector<2x8x32xf32> to vector<16x32xf32>
    %c0_2 = arith.constant 0 : index
    %c0_3 = arith.constant 0 : index
    %2 = vector.load %arg2[%c0_2, %c0_3] : memref<32x32xf32, #tpu.memory_space<vmem>>, vector<32x32xf32>
    %cst = arith.constant dense<0.000000e+00> : vector<16x32xf32>
    %3 = tpu.matmul %1, %2, %cst {dimension_numbers = #tpu.dot_dimension_numbers<[1], [0], [0], [1], [0, 0, 1, 1], [], []>} : vector<16x32xf32>, vector<32x32xf32>, vector<16x32xf32> -> vector<16x32xf32>
    %c0_4 = arith.constant 0 : index
    %c0_5 = arith.constant 0 : index
    %4 = vector.load %arg3[%c0_4, %c0_5] : memref<1x32xf32, #tpu.memory_space<vmem>>, vector<1x32xf32>
    %5 = vector.broadcast %4 : vector<1x32xf32> to vector<16x32xf32>
    %6 = arith.addf %3, %5 : vector<16x32xf32>
    %7 = math.tanh %6 : vector<16x32xf32>
    %c0_6 = arith.constant 0 : index
    %c0_7 = arith.constant 0 : index
    %8 = vector.load %arg4[%c0_6, %c0_7] : memref<1x32xf32, #tpu.memory_space<vmem>>, vector<1x32xf32>
    %9 = vector.broadcast %8 : vector<1x32xf32> to vector<16x32xf32>
    %10 = arith.mulf %7, %9 : vector<16x32xf32>
    %cst_8 = arith.constant dense<0.000000e+00> : vector<16xf32>
    %11 = vector.multi_reduction <add>, %10, %cst_8 [1] : vector<16x32xf32> to vector<16xf32>
    %12 = vector.shape_cast %11 : vector<16xf32> to vector<16x1xf32>
    %13 = vector.shape_cast %12 : vector<16x1xf32> to vector<2x8x1xf32>
    %cst_9 = arith.constant dense<0xFF800000> : vector<2x1xf32>
    %14 = vector.multi_reduction <maximumf>, %13, %cst_9 [1] : vector<2x8x1xf32> to vector<2x1xf32>
    %15 = vector.shape_cast %14 : vector<2x1xf32> to vector<2x1x1xf32>
    %16 = vector.broadcast %15 : vector<2x1x1xf32> to vector<2x8x1xf32>
    %17 = arith.subf %13, %16 : vector<2x8x1xf32>
    %18 = math.exp %17 : vector<2x8x1xf32>
    %cst_10 = arith.constant dense<0.000000e+00> : vector<2x1xf32>
    %19 = vector.multi_reduction <add>, %18, %cst_10 [1] : vector<2x8x1xf32> to vector<2x1xf32>
    %20 = vector.shape_cast %19 : vector<2x1xf32> to vector<2x1x1xf32>
    %21 = tpu.reciprocal %20 {approx = true} : vector<2x1x1xf32> -> vector<2x1x1xf32>
    %22 = arith.mulf %20, %21 : vector<2x1x1xf32>
    %cst_11 = arith.constant 2.000000e+00 : f32
    %23 = vector.broadcast %cst_11 : f32 to vector<2x1x1xf32>
    %24 = arith.subf %23, %22 : vector<2x1x1xf32>
    %25 = arith.mulf %21, %24 : vector<2x1x1xf32>
    %26 = arith.mulf %20, %25 : vector<2x1x1xf32>
    %cst_12 = arith.constant 2.000000e+00 : f32
    %27 = vector.broadcast %cst_12 : f32 to vector<2x1x1xf32>
    %28 = arith.subf %27, %26 : vector<2x1x1xf32>
    %29 = arith.mulf %25, %28 : vector<2x1x1xf32>
    %30 = vector.broadcast %18 : vector<2x8x1xf32> to vector<2x8x32xf32>
    %31 = arith.mulf %30, %0 : vector<2x8x32xf32>
    %cst_13 = arith.constant dense<0.000000e+00> : vector<2x32xf32>
    %32 = vector.multi_reduction <add>, %31, %cst_13 [1] : vector<2x8x32xf32> to vector<2x32xf32>
    %33 = vector.shape_cast %29 : vector<2x1x1xf32> to vector<2x1xf32>
    %34 = vector.broadcast %33 : vector<2x1xf32> to vector<2x32xf32>
    %35 = arith.mulf %32, %34 : vector<2x32xf32>
    %c0_14 = arith.constant 0 : index
    %c0_15 = arith.constant 0 : index
    %36 = vector.load %arg5[%c0_14, %c0_15] : memref<2x32xf32, #tpu.memory_space<vmem>>, vector<2x32xf32>
    tpu.vector_store %arg5[%c0_14, %c0_15], %35 {strides = array<i32>} : memref<2x32xf32, #tpu.memory_space<vmem>>, vector<2x32xf32>,
    %37 = tpu.iota {dimensions = array<i32: 1>} : vector<2x8x1xi32>
    %38 = vector.broadcast %15 : vector<2x1x1xf32> to vector<2x8x1xf32>
    %39 = arith.cmpf oeq, %13, %38 : vector<2x8x1xf32>
    %c8_i32 = arith.constant 8 : i32
    %40 = vector.broadcast %c8_i32 : i32 to vector<2x8x1xi32>
    %41 = arith.select %39, %37, %40 : vector<2x8x1xi1>, vector<2x8x1xi32>
    %cst_16 = arith.constant dense<2147483647> : vector<2x1xi32>
    %42 = vector.multi_reduction <minsi>, %41, %cst_16 [1] : vector<2x8x1xi32> to vector<2x1xi32>
    %c0_17 = arith.constant 0 : index
    %c0_18 = arith.constant 0 : index
    %43 = vector.load %arg6[%c0_17, %c0_18] : memref<2x1xi32, #tpu.memory_space<vmem>>, vector<2x1xi32>
    tpu.vector_store %arg6[%c0_17, %c0_18], %42 {strides = array<i32>} : memref<2x1xi32, #tpu.memory_space<vmem>>, vector<2x1xi32>,
    return
  }
  func.func @transform_0(%arg0: i32) -> (i32, i32, i32) {
    %c0_i32 = arith.constant 0 : i32
    %c0_i32_0 = arith.constant 0 : i32
    %c0_i32_1 = arith.constant 0 : i32
    return %arg0, %c0_i32, %c0_i32_0 : i32, i32, i32
  }
  func.func @transform_1(%arg0: i32) -> (i32, i32) {
    %c0_i32 = arith.constant 0 : i32
    %c0_i32_0 = arith.constant 0 : i32
    %c0_i32_1 = arith.constant 0 : i32
    return %c0_i32, %c0_i32_0 : i32, i32
  }
  func.func @transform_2(%arg0: i32) -> (i32, i32) {
    %c0_i32 = arith.constant 0 : i32
    %c0_i32_0 = arith.constant 0 : i32
    %c0_i32_1 = arith.constant 0 : i32
    return %c0_i32, %c0_i32_0 : i32, i32
  }
  func.func @transform_3(%arg0: i32) -> (i32, i32) {
    %c0_i32 = arith.constant 0 : i32
    %c0_i32_0 = arith.constant 0 : i32
    %c0_i32_1 = arith.constant 0 : i32
    return %c0_i32, %c0_i32_0 : i32, i32
  }
  func.func @transform_4(%arg0: i32) -> (i32, i32) {
    %c0_i32 = arith.constant 0 : i32
    %c0_i32_0 = arith.constant 0 : i32
    return %arg0, %c0_i32 : i32, i32
  }
  func.func @transform_5(%arg0: i32) -> (i32, i32) {
    %c0_i32 = arith.constant 0 : i32
    %c0_i32_0 = arith.constant 0 : i32
    return %arg0, %c0_i32 : i32, i32
  }
}

</mosaic_0001>

<llo_original>
// kernel: tpu_custom_call.1
$region0: #{tpu_custom_call.1}
  #allocation0 [shape = 'u32[]', space=smem, size = 0x4, offset = 0x4, fixed_abs, tag = 'smem constant byte address 0x4 - core index']
  #allocation1 [shape = 'u32[144,128]{1,0:T(1,128)}', space=vmem, size = 0x12000, scoped, tag = 'internal scratch']
  %s0 = inlined_call_operand.hbm [shape: f32[2,8,32], index: 0, kind: input, shape index: {}]
  %s1 = inlined_call_operand.hbm [shape: f32[32,32], index: 1, kind: input, shape index: {}]
  %s2 = inlined_call_operand.vmem [shape: f32[1,32], index: 2, kind: input, shape index: {}]
  %s3 = inlined_call_operand.vmem [shape: f32[1,32], index: 3, kind: input, shape index: {}]
  %s4 = inlined_call_operand.hbm [shape: f32[2,32], index: 4, kind: output, shape index: {0}]
  %s5 = inlined_call_operand.vmem [shape: s32[2,1], index: 5, kind: output, shape index: {1}]
  %6 = xla_tuple %s4, %s5
  %s7 = sld [smem:[#allocation0]]
  $region42: #{tpu_custom_call.1} parent=0
    _
  %s9 = ssub.s32 1, %s7
  %s10 = scalar_select 0, %s9, %s7
  $region1: #{tpu_custom_call.1} parent=0
    #allocation2 [shape = 'u8[8192]{0}', space=vmem, size = 0x2000, scoped, tag = 'input window, operand 0, single buffered']
    #allocation3 [shape = 's32[1]{0}', space=sflag, size = 0x4, scoped, tag = 'scoped memory for tpu_custom_call.1']
    #allocation4 [shape = 's32[1]{0}', space=sflag, size = 0x4, scoped, tag = 'scoped memory for tpu_custom_call.1']
    #allocation5 [shape = 'u8[16384]{0}', space=vmem, size = 0x4000, scoped, tag = 'input window, operand 1, single buffered']
    #allocation6 [shape = 's32[1]{0}', space=sflag, size = 0x4, scoped, tag = 'scoped memory for tpu_custom_call.1']
    #allocation7 [shape = 'u8[1024]{0}', space=vmem, size = 0x400, scoped, tag = 'output window, operand 0, single buffered']
    %11 = vsyncpa [#allocation3], 0
    %12 = vsyncpa [#allocation6], 0
    %13 = vsyncpa [#allocation4], 0
    // Predicated region
    $region2: #{tpu_custom_call.1} parent=1 // pred_check
      _
    $region3: #{tpu_custom_call.1} parent=1 // pred_check_branch
      %15 = sbr.rel (0) target = $region5
    $region4: #{tpu_custom_call.1} parent=1 // pred_region
      %s17 = ssub.s32 256, 256
      %18 = vsyncadd [#allocation3], %s17
      %s19 = sshll.u32 [#allocation2], 4
      %s20 = int_to_ptr.vmem [resolvable:$true] %s19
      %25 = dma.hbm_to_vmem [thread:$0]  %s0, 256, %s20, [#allocation3], 128, 128, 8
    $region5: #{tpu_custom_call.1} parent=1 // pred_fallthru
      _
    // Predicated region
    $region6: #{tpu_custom_call.1} parent=1 // pred_check
      _
    $region7: #{tpu_custom_call.1} parent=1 // pred_check_branch
      %27 = sbr.rel (0) target = $region9
    $region8: #{tpu_custom_call.1} parent=1 // pred_region
      %s29 = ssub.s32 512, 512
      %30 = vsyncadd [#allocation6], %s29
      %s31 = sshll.u32 [#allocation5], 4
      %s32 = int_to_ptr.vmem [resolvable:$true] %s31
      %37 = dma.hbm_to_vmem [thread:$0]  %s1, 512, %s32, [#allocation6], 128, 128, 8
    $region9: #{tpu_custom_call.1} parent=1 // pred_fallthru
      _
    // Predicated region
    $region10: #{tpu_custom_call.1} parent=1 // pred_check
      _
    $region11: #{tpu_custom_call.1} parent=1 // pred_check_branch
      %39 = sbr.rel (0) target = $region13
    $region12: #{tpu_custom_call.1} parent=1 // pred_region
      _
    $region13: #{tpu_custom_call.1} parent=1 // pred_fallthru
      _
    // Predicated region
    $region14: #{tpu_custom_call.1} parent=1 // pred_check
      _
    $region15: #{tpu_custom_call.1} parent=1 // pred_check_branch
      %41 = sbr.rel (0) target = $region17
    $region16: #{tpu_custom_call.1} parent=1 // pred_region
      _
    $region17: #{tpu_custom_call.1} parent=1 // pred_fallthru
      _
    // Predicated region
    $region18: #{tpu_custom_call.1} parent=1 // pred_check
      _
    $region19: #{tpu_custom_call.1} parent=1 // pred_check_branch
      %43 = sbr.rel (0) target = $region21
    $region20: #{tpu_custom_call.1} parent=1 // pred_region
      %44 = dma.done [#allocation3], 256
    $region21: #{tpu_custom_call.1} parent=1 // pred_fallthru
      _
    // Predicated region
    $region22: #{tpu_custom_call.1} parent=1 // pred_check
      _
    $region23: #{tpu_custom_call.1} parent=1 // pred_check_branch
      %46 = sbr.rel (0) target = $region25
    $region24: #{tpu_custom_call.1} parent=1 // pred_region
      %47 = dma.done [#allocation6], 512
    $region25: #{tpu_custom_call.1} parent=1 // pred_fallthru
      _
    %v48 = vld [vmem:[#allocation2] sm:$0xff]
    %v49 = vld [vmem:[#allocation2 + $0x8] sm:$0xff]
    %v50 = vld [vmem:[#allocation5] sm:$0xff]
    %v51 = vld [vmem:[#allocation5 + $0x8] sm:$0xff]
    %v52 = vld [vmem:[#allocation5 + $0x10] sm:$0xff]
    %v53 = vld [vmem:[#allocation5 + $0x18] sm:$0xff]
    %v54 = vld [vmem:[%s2] sm:$0x1]
    %v56 = vlaneseq
    %v57 = vshrl.u32 %v56, 7
    %v58 = vsub.s32 0, %v57
    %v59 = vrot.slane %v54, %v58
    %vm61 = vcmask 261120
    %v63 = vsel %vm61, %v48, 0
    %v66 = vsel %vm61, %v49, 0
    %68 = vmatprep.subr.mxu0 0.0
    %69 = vmatpush1.msra.mxu0 %v50
    %70 = vmatprep.subr.mxu0 0.0
    %71 = vmatpush1.msra.mxu0 %v51
    %72 = vmatprep.subr.mxu0 0.0
    %73 = vmatpush1.msra.mxu0 %v52
    %74 = vmatprep.subr.mxu0 0.0
    %75 = vmatpush1.msra.mxu0 %v53
    %76 = vmatprep.subr.mxu0 0.0
    %77 = vmatpush1.msra.mxu0 0.0
    %78 = vmatprep.subr.mxu0 0.0
    %79 = vmatpush1.msra.mxu0 0.0
    %80 = vmatprep.subr.mxu0 0.0
    %81 = vmatpush1.msra.mxu0 0.0
    %82 = vmatprep.subr.mxu0 0.0
    %83 = vmatpush1.msra.mxu0 0.0
    %84 = vmatprep.subr.mxu0 0.0
    %85 = vmatpush1.msra.mxu0 0.0
    %86 = vmatprep.subr.mxu0 0.0
    %87 = vmatpush1.msra.mxu0 0.0
    %88 = vmatprep.subr.mxu0 0.0
    %89 = vmatpush1.msra.mxu0 0.0
    %90 = vmatprep.subr.mxu0 0.0
    %91 = vmatpush1.msra.mxu0 0.0
    %92 = vmatprep.subr.mxu0 0.0
    %93 = vmatpush1.msra.mxu0 0.0
    %94 = vmatprep.subr.mxu0 0.0
    %95 = vmatpush1.msra.mxu0 0.0
    %96 = vmatprep.subr.mxu0 0.0
    %97 = vmatpush1.msra.mxu0 0.0
    %98 = vmatprep.subr.mxu0 0.0
    %99 = vmatpush1.msra.mxu0 0.0
    %100 = vmatprep.subr.mxu0 0.0
    %101 = vmatpush1.msra.mxu0 0.0
    %102 = vmatprep.subr.mxu0 0.0
    %103 = vmatpush1.msra.mxu0 0.0
    %104 = vmatprep.subr.mxu0 0.0
    %105 = vmatpush1.msra.mxu0 0.0
    %106 = vmatprep.subr.mxu0 0.0
    %107 = vmatpush1.msra.mxu0 0.0
    %108 = vmatprep.subr.mxu0 0.0
    %109 = vmatpush1.msra.mxu0 0.0
    %110 = vmatprep.subr.mxu0 0.0
    %111 = vmatpush1.msra.mxu0 0.0
    %112 = vmatprep.subr.mxu0 0.0
    %113 = vmatpush1.msra.mxu0 0.0
    %114 = vmatprep.subr.mxu0 0.0
    %115 = vmatpush1.msra.mxu0 0.0
    %116 = vmatprep.subr.mxu0 0.0
    %117 = vmatpush1.msra.mxu0 0.0
    %118 = vmatprep.subr.mxu0 0.0
    %119 = vmatpush1.msra.mxu0 0.0
    %120 = vmatprep.subr.mxu0 0.0
    %121 = vmatpush1.msra.mxu0 0.0
    %122 = vmatprep.subr.mxu0 0.0
    %123 = vmatpush1.msra.mxu0 0.0
    %124 = vmatprep.subr.mxu0 0.0
    %125 = vmatpush1.msra.mxu0 0.0
    %126 = vmatprep.subr.mxu0 0.0
    %127 = vmatpush1.msra.mxu0 0.0
    %128 = vmatprep.subr.mxu0 0.0
    %129 = vmatpush1.msra.mxu0 0.0
    %130 = vmatprep.subr.mxu0 0.0
    %131 = vmatpush1.msra.mxu0 0.0
    %132 = vmatprep.mubr.f32.mxu0 0.0
    %133 = vmatmul.mubr.f32.gmra.mrb[0].mxu0 %v63
    %v134 = vpop.f32.mrb[0].mxu0
    %v135 = vadd.f32 %v59, %v134
    %v136 = vpop.f32.mrb[0].mxu0
    %137 = vmatprep.mubr.f32.mxu0 0.0
    %138 = vmatmul.mubr.f32.gmra.mrb[0].mxu0 %v66
    %v139 = vpop.f32.mrb[0].mxu0
    %v140 = vadd.f32 %v59, %v139
    %v141 = vpop.f32.mrb[0].mxu0
    %142 = vdwg.mxu0
    %v143 = vtanh.pop %v135
    %v144 = vtanh.pop %v140
    %v145 = vld [vmem:[%s3] sm:$0x1]
    %v147 = vlaneseq
    %v148 = vshrl.u32 %v147, 7
    %v149 = vsub.s32 0, %v148
    %v150 = vrot.slane %v145, %v149
    %v152 = vmul.f32 %v143, %v150
    %v153 = vmul.f32 %v144, %v150
    %v154 = vsel %vm61, %v152, 0.0
    %155 = vadd.xlane.f32.xlu0 %v154
    %v156 = vpop.xlane.xlu0 %155
    %v157 = vsel %vm61, %v153, 0.0
    %158 = vadd.xlane.f32.xlu0 %v157
    %v159 = vpop.xlane.xlu0 %158
    %v160 = vrot.slane %v156, 4
    %v161 = vmax.f32 %v156, %v160
    %v162 = vrot.slane %v161, 2
    %v163 = vmax.f32 %v161, %v162
    %v164 = vrot.slane %v163, 1
    %v165 = vmax.f32 %v163, %v164
    %v166 = vrot.slane %v159, 4
    %v167 = vmax.f32 %v159, %v166
    %v168 = vrot.slane %v167, 2
    %v169 = vmax.f32 %v167, %v168
    %v170 = vrot.slane %v169, 1
    %v171 = vmax.f32 %v169, %v170
    %v172 = vsub.f32 %v156, %v165
    %v173 = vsub.f32 %v159, %v171
    %v174 = vmul.f32 %v172, 1.442695
    %v175 = vpow.pop %v174
    %v176 = vmul.f32 %v173, 1.442695
    %v177 = vpow.pop %v176
    %v178 = vrot.slane %v175, 4
    %v179 = vadd.f32 %v175, %v178
    %v180 = vrot.slane %v179, 2
    %v181 = vadd.f32 %v179, %v180
    %v182 = vrot.slane %v181, 1
    %v183 = vadd.f32 %v181, %v182
    %v184 = vrot.slane %v177, 4
    %v185 = vadd.f32 %v177, %v184
    %v186 = vrot.slane %v185, 2
    %v187 = vadd.f32 %v185, %v186
    %v188 = vrot.slane %v187, 1
    %v189 = vadd.f32 %v187, %v188
    %v190 = vrcp.pop %v183
    %v191 = vrcp.pop %v189
    %v192 = vmul.f32 %v183, %v190
    %v193 = vmul.f32 %v189, %v191
    %v194 = vsub.f32 2.0, %v192
    %v195 = vsub.f32 2.0, %v193
    %v196 = vmul.f32 %v190, %v194
    %v197 = vmul.f32 %v191, %v195
    %v198 = vmul.f32 %v183, %v196
    %v199 = vmul.f32 %v189, %v197
    %v200 = vsub.f32 2.0, %v198
    %v201 = vsub.f32 2.0, %v199
    %v202 = vmul.f32 %v196, %v200
    %v203 = vmul.f32 %v197, %v201
    %v204 = vmul.f32 %v175, %v48
    %v205 = vmul.f32 %v177, %v49
    %v206 = vsel %vm61, %v204, 0.0
    %v207 = vrot.slane %v206, 4
    %v208 = vadd.f32 %v206, %v207
    %v209 = vrot.slane %v208, 2
    %v210 = vadd.f32 %v208, %v209
    %v211 = vrot.slane %v210, 1
    %v212 = vadd.f32 %v210, %v211
    %v213 = vsel %vm61, %v205, 0.0
    %v214 = vrot.slane %v213, 4
    %v215 = vadd.f32 %v213, %v214
    %v216 = vrot.slane %v215, 2
    %v217 = vadd.f32 %v215, %v216
    %v218 = vrot.slane %v217, 1
    %v219 = vadd.f32 %v217, %v218
    %v220 = vmul.f32 %v212, %v202
    %v221 = vmul.f32 %v219, %v203
    %vm224 = vcmask 1041409
    %v225 = vsel %vm224, %v221, %v220
    %vm227 = vcmask 254976
    %228 = vst.msk [vmem:[#allocation7] sm:$0x3] %vm227, %v225
    %v229 = vlaneseq
    %v230 = vshrl.u32 %v229, 7
    %vm231 = vcmp.eq.f32.partialorder %v156, %v165
    %vm232 = vcmp.eq.f32.partialorder %v159, %v171
    %v233 = vsel %vm231, %v230, 8
    %v234 = vsel %vm232, %v230, 8
    %v235 = vrot.slane %v233, 4
    %vm236 = vcmp.lt.s32.totalorder %v233, %v235
    %v237 = vsel %vm236, %v233, %v235
    %v238 = vrot.slane %v237, 2
    %vm239 = vcmp.lt.s32.totalorder %v237, %v238
    %v240 = vsel %vm239, %v237, %v238
    %v241 = vrot.slane %v240, 1
    %vm242 = vcmp.lt.s32.totalorder %v240, %v241
    %v243 = vsel %vm242, %v240, %v241
    %v244 = vrot.slane %v234, 4
    %vm245 = vcmp.lt.s32.totalorder %v234, %v244
    %v246 = vsel %vm245, %v234, %v244
    %v247 = vrot.slane %v246, 2
    %vm248 = vcmp.lt.s32.totalorder %v246, %v247
    %v249 = vsel %vm248, %v246, %v247
    %v250 = vrot.slane %v249, 1
    %vm251 = vcmp.lt.s32.totalorder %v249, %v250
    %v252 = vsel %vm251, %v249, %v250
    %v253 = vsel %vm224, %v252, %v243
    %vm254 = vcmask 1024
    %255 = vst.msk [vmem:[%s5] sm:$0x3] %vm254, %v253
    // Predicated region
    $region26: #{tpu_custom_call.1} parent=1 // pred_check
      _
    $region27: #{tpu_custom_call.1} parent=1 // pred_check_branch
      %257 = sbr.rel (0) target = $region29
    $region28: #{tpu_custom_call.1} parent=1 // pred_region
      %s259 = ssub.s32 32, 32
      %260 = vsyncadd [#allocation4], %s259
      %s262 = sshll.u32 [#allocation7], 4
      %s263 = int_to_ptr.vmem [resolvable:$true] %s262
      %265 = dma.vmem_to_hbm [thread:$0]  %s263, 32, %s4, [#allocation4]
    $region29: #{tpu_custom_call.1} parent=1 // pred_fallthru
      _
    // Predicated region
    $region30: #{tpu_custom_call.1} parent=1 // pred_check
      _
    $region31: #{tpu_custom_call.1} parent=1 // pred_check_branch
      %267 = sbr.rel (0) target = $region33
    $region32: #{tpu_custom_call.1} parent=1 // pred_region
      _
    $region33: #{tpu_custom_call.1} parent=1 // pred_fallthru
      _
    // Predicated region
    $region34: #{tpu_custom_call.1} parent=1 // pred_check
      _
    $region35: #{tpu_custom_call.1} parent=1 // pred_check_branch
      %269 = sbr.rel (0) target = $region37
    $region36: #{tpu_custom_call.1} parent=1 // pred_region
      %270 = dma.done [#allocation4], 32
    $region37: #{tpu_custom_call.1} parent=1 // pred_fallthru
      _
    // Predicated region
    $region38: #{tpu_custom_call.1} parent=1 // pred_check
      _
    $region39: #{tpu_custom_call.1} parent=1 // pred_check_branch
      %272 = sbr.rel (0) target = $region41
    $region40: #{tpu_custom_call.1} parent=1 // pred_region
      _
    $region41: #{tpu_custom_call.1} parent=1 // pred_fallthru
      _
    %273 = vsyncpa [#allocation3], 1
    %274 = vsyncpa [#allocation6], 1
    %275 = vsyncpa [#allocation4], 1

</llo_original>
